<compile_context>
chip_gen: v7x
topology: tpu7x:2x2x1
jax: 0.10.0
libtpu: 0.0.40
codegen_flags: <defaults>
</compile_context>

<pallas_src>
import jax
import jax.numpy as jnp
from jax.experimental import pallas as pl
from jax.experimental.pallas import tpu as pltpu

LANE = 128      # lane width -- hidden feature dims zero-padded to this
SUB = 16        # batch-tile granularity: a packed bf16 vreg tile is (16, 128)
TILE_B = 1024   # max batch rows per grid step (amortizes ~0.35 us/step overhead)


def _round_up(n, m):
    return ((n + m - 1) // m) * m


def _mlp_kernel(x_ref, w1_ref, b1_ref, w2_ref, b2_ref, w3_ref, b3_ref,
                wc_ref, bc_ref, o_ref):
    """One batch tile through the 4-layer MLP.

    Layer 1: f32 x (straight from HBM, no wrapper cast) x f32 w1 on the MXU.
    Layers 2/3/classifier: activations cast to bf16 (free VPU work), bf16
    weights, f32 MXU accumulation. Bias add + ReLU stay f32 on the VPU.
    Dropout(p=0.5) layers are identity (eval-mode inference).
    Classifier output is written unpadded: o_ref is (tile_b, n_out).
    """
    wdt = w2_ref.dtype  # bf16 compute dtype for layers 2+

    # Layer 1: Linear(inputs, 100) + ReLU   (Dropout -> identity)
    h = jnp.dot(x_ref[...], w1_ref[...], preferred_element_type=jnp.float32)
    h = jnp.maximum(h + b1_ref[...], 0.0)
    # Layer 2: Linear(100, 50) + ReLU
    h = jnp.dot(h.astype(wdt), w2_ref[...], preferred_element_type=jnp.float32)
    h = jnp.maximum(h + b2_ref[...], 0.0)
    # Layer 3: Linear(50, 20) + ReLU        (Dropout -> identity)
    h = jnp.dot(h.astype(wdt), w3_ref[...], preferred_element_type=jnp.float32)
    h = jnp.maximum(h + b3_ref[...], 0.0)
    # Classifier: Linear(20, outputs) -- narrow (n_out-lane) output, no padding.
    o = jnp.dot(h.astype(wdt), wc_ref[...], preferred_element_type=jnp.float32)
    o_ref[...] = (o + bc_ref[...]).astype(o_ref.dtype)


def prepare_params(params, compute_dtype=jnp.bfloat16):
    """One-time prep (parameter-load time, not per forward call):
      * transpose torch (out, in) weights to (in, out)
      * zero-pad hidden feature dims (100/50/20) to 128 lanes
      * w1 stays f32 and K-unpadded so layer 1 matches the f32 torch reference
        and x needs no wrapper-side pad/cast
      * w2/w3/wc cast to the bf16 compute dtype (VMEM-resident, tiny)
      * classifier output dim left UNpadded -> kernel writes exactly (B, n_out)
      * biases stay f32 (added after the f32-accumulated dot)
    """
    n_in = params["w1"].shape[1]
    n_out = params["wc"].shape[0]
    h1_p = _round_up(100, LANE)   # 128
    h2_p = _round_up(50, LANE)    # 128
    h3_p = _round_up(20, LANE)    # 128

    def pad2(a, r, c):
        return jnp.pad(a, ((0, r - a.shape[0]), (0, c - a.shape[1])))

    return {
        "w1": pad2(params["w1"].T.astype(jnp.float32), n_in, h1_p),
        "w2": pad2(params["w2"].T, h1_p, h2_p).astype(compute_dtype),
        "w3": pad2(params["w3"].T, h2_p, h3_p).astype(compute_dtype),
        "wc": pad2(params["wc"].T, h3_p, n_out).astype(compute_dtype),
        "b1": pad2(params["b1"][None, :].astype(jnp.float32), 1, h1_p),
        "b2": pad2(params["b2"][None, :].astype(jnp.float32), 1, h2_p),
        "b3": pad2(params["b3"][None, :].astype(jnp.float32), 1, h3_p),
        "bc": params["bc"][None, :].astype(jnp.float32),
    }


@jax.jit
def ann_wsnet_forward(x, prepped):
    """x: (B, inputs) float32 (fed straight to the kernel, no pad/cast pass).
    prepped: output of prepare_params(). Returns (B, outputs) float32."""
    B, n_in = x.shape
    assert prepped["w1"].shape[0] == n_in, "x feature dim mismatch"
    n_out = prepped["wc"].shape[1]

    # Batch tiling: large tiles amortize per-step overhead and produce big
    # lane-dense DMAs; cap at ~ceil(B/2) (rounded to SUB) so grid_n >= 2
    # whenever B > SUB, letting the "parallel" axis split across v7x megacore.
    tile_b = min(TILE_B, _round_up(pl.cdiv(B, 2), SUB))
    if tile_b >= B:
        tile_b = B            # single tile: block == full batch dim (always legal)
    grid_n = pl.cdiv(B, tile_b)   # ragged last tile masked by Pallas (no batch pad)

    const = lambda a: pl.BlockSpec(a.shape, lambda i: (0, 0))  # VMEM-resident

    return pl.pallas_call(
        _mlp_kernel,
        out_shape=jax.ShapeDtypeStruct((B, n_out), jnp.float32),
        grid=(grid_n,),
        in_specs=[
            # x: batch-tiled, f32, feature dim = full array dim (unpadded).
            pl.BlockSpec((tile_b, n_in), lambda i: (i, 0)),
            const(prepped["w1"]), const(prepped["b1"]),
            const(prepped["w2"]), const(prepped["b2"]),
            const(prepped["w3"]), const(prepped["b3"]),
            const(prepped["wc"]), const(prepped["bc"]),
        ],
        # Output: batch-tiled, unpadded n_out lanes -> no epilogue slice pass.
        out_specs=pl.BlockSpec((tile_b, n_out), lambda i: (i, 0)),
        compiler_params=pltpu.CompilerParams(
            dimension_semantics=("parallel",),   # megacore-splittable batch axis
            vmem_limit_bytes=32 << 20,           # fits v7x's 64 MiB with headroom
        ),
    )(x, prepped["w1"], prepped["b1"], prepped["w2"], prepped["b2"],
      prepped["w3"], prepped["b3"], prepped["wc"], prepped["bc"])


def init_params(key, inputs, outputs):
    """nn.init.normal_(weight, std=0.01); bias = 0  -- torch (out, in) convention."""
    k1, k2, k3, k4 = jax.random.split(key, 4)
    std = 0.01
    return {
        "w1": std * jax.random.normal(k1, (100, inputs), jnp.float32),
        "b1": jnp.zeros((100,), jnp.float32),
        "w2": std * jax.random.normal(k2, (50, 100), jnp.float32),
        "b2": jnp.zeros((50,), jnp.float32),
        "w3": std * jax.random.normal(k3, (20, 50), jnp.float32),
        "b3": jnp.zeros((20,), jnp.float32),
        "wc": std * jax.random.normal(k4, (outputs, 20), jnp.float32),
        "bc": jnp.zeros((outputs,), jnp.float32),
    }


def ann_wsnet_ref(x, p):
    """Pure-JAX f32 reference of the PyTorch forward (eval-mode dropout)."""
    h = jnp.maximum(x @ p["w1"].T + p["b1"], 0.0)
    h = jnp.maximum(h @ p["w2"].T + p["b2"], 0.0)
    h = jnp.maximum(h @ p["w3"].T + p["b3"], 0.0)
    return h @ p["wc"].T + p["bc"]


if __name__ == "__main__":
    key = jax.random.PRNGKey(0)
    k_x, k_p, k_x2 = jax.random.split(key, 3)

    B, INPUTS, OUTPUTS = 2, 32, 4
    x = jax.random.normal(k_x, (B, INPUTS), jnp.float32)
    params = init_params(k_p, INPUTS, OUTPUTS)
    prepped = prepare_params(params)   # one-time weight pad/transpose/cast

    # Small-batch path (single full-batch tile, grid_n == 1).
    y = ann_wsnet_forward(x, prepped)
    jax.block_until_ready(y)
    y_ref = ann_wsnet_ref(x, params)
    assert y.shape == (B, OUTPUTS)
    assert jnp.allclose(y, y_ref, atol=1e-5, rtol=5e-2), "mismatch (small batch)"

    # Larger batch: exercises the 2-step batch grid (megacore-splittable),
    # resident weights, and the ragged (masked) last tile with no batch pad.
    B2 = 1040
    x2 = jax.random.normal(k_x2, (B2, INPUTS), jnp.float32)
    y2 = ann_wsnet_forward(x2, prepped)
    jax.block_until_ready(y2)
    y2_ref = ann_wsnet_ref(x2, params)
    assert y2.shape == (B2, OUTPUTS)
    assert jnp.allclose(y2, y2_ref, atol=1e-5, rtol=5e-2), "mismatch (batch-tiled)"

    print("KERNEL_OK")
</pallas_src>

<mosaic_0001>
module attributes {stable_mosaic.version = 11 : i64} {
  func.func @_mlp_kernel(%arg0: i32, %arg1: memref<2x32xf32, #tpu.memory_space<vmem>>, %arg2: memref<32x128xf32, #tpu.memory_space<vmem>>, %arg3: memref<1x128xf32, #tpu.memory_space<vmem>>, %arg4: memref<128x128xbf16, #tpu.memory_space<vmem>>, %arg5: memref<1x128xf32, #tpu.memory_space<vmem>>, %arg6: memref<128x128xbf16, #tpu.memory_space<vmem>>, %arg7: memref<1x128xf32, #tpu.memory_space<vmem>>, %arg8: memref<128x4xbf16, #tpu.memory_space<vmem>>, %arg9: memref<1x4xf32, #tpu.memory_space<vmem>>, %arg10: memref<2x4xf32, #tpu.memory_space<vmem>>) attributes {dimension_semantics = [#tpu.dimension_semantics<parallel>], iteration_bounds = array<i64: 1>, scalar_prefetch = 0 : i64, scratch_operands = 0 : i64, tpu.core_type = #tpu.core_type<tc>, window_params = [{transform_indices = @transform_0, window_bounds = array<i64: 2, 32>}, {pipeline_mode = #tpu.pipeline_mode<synchronous>, transform_indices = @transform_1, window_bounds = array<i64: 32, 128>}, {pipeline_mode = #tpu.pipeline_mode<synchronous>, transform_indices = @transform_2, window_bounds = array<i64: 1, 128>}, {pipeline_mode = #tpu.pipeline_mode<synchronous>, transform_indices = @transform_3, window_bounds = array<i64: 128, 128>}, {pipeline_mode = #tpu.pipeline_mode<synchronous>, transform_indices = @transform_4, window_bounds = array<i64: 1, 128>}, {pipeline_mode = #tpu.pipeline_mode<synchronous>, transform_indices = @transform_5, window_bounds = array<i64: 128, 128>}, {pipeline_mode = #tpu.pipeline_mode<synchronous>, transform_indices = @transform_6, window_bounds = array<i64: 1, 128>}, {pipeline_mode = #tpu.pipeline_mode<synchronous>, transform_indices = @transform_7, window_bounds = array<i64: 128, 4>}, {pipeline_mode = #tpu.pipeline_mode<synchronous>, transform_indices = @transform_8, window_bounds = array<i64: 1, 4>}, {transform_indices = @transform_9, window_bounds = array<i64: 2, 4>}]} {
    %c0 = arith.constant 0 : index
    %c0_0 = arith.constant 0 : index
    %0 = vector.load %arg1[%c0, %c0_0] : memref<2x32xf32, #tpu.memory_space<vmem>>, vector<2x32xf32>
    %c0_1 = arith.constant 0 : index
    %c0_2 = arith.constant 0 : index
    %1 = vector.load %arg2[%c0_1, %c0_2] : memref<32x128xf32, #tpu.memory_space<vmem>>, vector<32x128xf32>
    %cst = arith.constant dense<0.000000e+00> : vector<2x128xf32>
    %2 = tpu.matmul %0, %1, %cst {dimension_numbers = #tpu.dot_dimension_numbers<[1], [0], [0], [1], [0, 0, 1, 1], [], []>} : vector<2x32xf32>, vector<32x128xf32>, vector<2x128xf32> -> vector<2x128xf32>
    %c0_3 = arith.constant 0 : index
    %c0_4 = arith.constant 0 : index
    %3 = vector.load %arg3[%c0_3, %c0_4] : memref<1x128xf32, #tpu.memory_space<vmem>>, vector<1x128xf32>
    %4 = vector.broadcast %3 : vector<1x128xf32> to vector<2x128xf32>
    %5 = arith.addf %2, %4 : vector<2x128xf32>
    %cst_5 = arith.constant 0.000000e+00 : f32
    %6 = vector.broadcast %cst_5 : f32 to vector<2x128xf32>
    %7 = arith.maximumf %5, %6 : vector<2x128xf32>
    %8 = arith.truncf %7 : vector<2x128xf32> to vector<2x128xbf16>
    %c0_6 = arith.constant 0 : index
    %c0_7 = arith.constant 0 : index
    %9 = vector.load %arg4[%c0_6, %c0_7] : memref<128x128xbf16, #tpu.memory_space<vmem>>, vector<128x128xbf16>
    %cst_8 = arith.constant dense<0.000000e+00> : vector<2x128xf32>
    %10 = tpu.matmul %8, %9, %cst_8 {dimension_numbers = #tpu.dot_dimension_numbers<[1], [0], [0], [1], [0, 0, 1, 1], [], []>} : vector<2x128xbf16>, vector<128x128xbf16>, vector<2x128xf32> -> vector<2x128xf32>
    %c0_9 = arith.constant 0 : index
    %c0_10 = arith.constant 0 : index
    %11 = vector.load %arg5[%c0_9, %c0_10] : memref<1x128xf32, #tpu.memory_space<vmem>>, vector<1x128xf32>
    %12 = vector.broadcast %11 : vector<1x128xf32> to vector<2x128xf32>
    %13 = arith.addf %10, %12 : vector<2x128xf32>
    %cst_11 = arith.constant 0.000000e+00 : f32
    %14 = vector.broadcast %cst_11 : f32 to vector<2x128xf32>
    %15 = arith.maximumf %13, %14 : vector<2x128xf32>
    %16 = arith.truncf %15 : vector<2x128xf32> to vector<2x128xbf16>
    %c0_12 = arith.constant 0 : index
    %c0_13 = arith.constant 0 : index
    %17 = vector.load %arg6[%c0_12, %c0_13] : memref<128x128xbf16, #tpu.memory_space<vmem>>, vector<128x128xbf16>
    %cst_14 = arith.constant dense<0.000000e+00> : vector<2x128xf32>
    %18 = tpu.matmul %16, %17, %cst_14 {dimension_numbers = #tpu.dot_dimension_numbers<[1], [0], [0], [1], [0, 0, 1, 1], [], []>} : vector<2x128xbf16>, vector<128x128xbf16>, vector<2x128xf32> -> vector<2x128xf32>
    %c0_15 = arith.constant 0 : index
    %c0_16 = arith.constant 0 : index
    %19 = vector.load %arg7[%c0_15, %c0_16] : memref<1x128xf32, #tpu.memory_space<vmem>>, vector<1x128xf32>
    %20 = vector.broadcast %19 : vector<1x128xf32> to vector<2x128xf32>
    %21 = arith.addf %18, %20 : vector<2x128xf32>
    %cst_17 = arith.constant 0.000000e+00 : f32
    %22 = vector.broadcast %cst_17 : f32 to vector<2x128xf32>
    %23 = arith.maximumf %21, %22 : vector<2x128xf32>
    %24 = arith.truncf %23 : vector<2x128xf32> to vector<2x128xbf16>
    %c0_18 = arith.constant 0 : index
    %c0_19 = arith.constant 0 : index
    %25 = vector.load %arg8[%c0_18, %c0_19] : memref<128x4xbf16, #tpu.memory_space<vmem>>, vector<128x4xbf16>
    %cst_20 = arith.constant dense<0.000000e+00> : vector<2x4xf32>
    %26 = tpu.matmul %24, %25, %cst_20 {dimension_numbers = #tpu.dot_dimension_numbers<[1], [0], [0], [1], [0, 0, 1, 1], [], []>} : vector<2x128xbf16>, vector<128x4xbf16>, vector<2x4xf32> -> vector<2x4xf32>
    %c0_21 = arith.constant 0 : index
    %c0_22 = arith.constant 0 : index
    %27 = vector.load %arg9[%c0_21, %c0_22] : memref<1x4xf32, #tpu.memory_space<vmem>>, vector<1x4xf32>
    %28 = vector.broadcast %27 : vector<1x4xf32> to vector<2x4xf32>
    %29 = arith.addf %26, %28 : vector<2x4xf32>
    %c0_23 = arith.constant 0 : index
    %c0_24 = arith.constant 0 : index
    %30 = vector.load %arg10[%c0_23, %c0_24] : memref<2x4xf32, #tpu.memory_space<vmem>>, vector<2x4xf32>
    tpu.vector_store %arg10[%c0_23, %c0_24], %29 {strides = array<i32>} : memref<2x4xf32, #tpu.memory_space<vmem>>, vector<2x4xf32>,
    return
  }
  func.func @transform_0(%arg0: i32) -> (i32, i32) {
    %c0_i32 = arith.constant 0 : i32
    %c0_i32_0 = arith.constant 0 : i32
    return %arg0, %c0_i32 : i32, i32
  }
  func.func @transform_1(%arg0: i32) -> (i32, i32) {
    %c0_i32 = arith.constant 0 : i32
    %c0_i32_0 = arith.constant 0 : i32
    %c0_i32_1 = arith.constant 0 : i32
    return %c0_i32, %c0_i32_0 : i32, i32
  }
  func.func @transform_2(%arg0: i32) -> (i32, i32) {
    %c0_i32 = arith.constant 0 : i32
    %c0_i32_0 = arith.constant 0 : i32
    %c0_i32_1 = arith.constant 0 : i32
    return %c0_i32, %c0_i32_0 : i32, i32
  }
  func.func @transform_3(%arg0: i32) -> (i32, i32) {
    %c0_i32 = arith.constant 0 : i32
    %c0_i32_0 = arith.constant 0 : i32
    %c0_i32_1 = arith.constant 0 : i32
    return %c0_i32, %c0_i32_0 : i32, i32
  }
  func.func @transform_4(%arg0: i32) -> (i32, i32) {
    %c0_i32 = arith.constant 0 : i32
    %c0_i32_0 = arith.constant 0 : i32
    %c0_i32_1 = arith.constant 0 : i32
    return %c0_i32, %c0_i32_0 : i32, i32
  }
  func.func @transform_5(%arg0: i32) -> (i32, i32) {
    %c0_i32 = arith.constant 0 : i32
    %c0_i32_0 = arith.constant 0 : i32
    %c0_i32_1 = arith.constant 0 : i32
    return %c0_i32, %c0_i32_0 : i32, i32
  }
  func.func @transform_6(%arg0: i32) -> (i32, i32) {
    %c0_i32 = arith.constant 0 : i32
    %c0_i32_0 = arith.constant 0 : i32
    %c0_i32_1 = arith.constant 0 : i32
    return %c0_i32, %c0_i32_0 : i32, i32
  }
  func.func @transform_7(%arg0: i32) -> (i32, i32) {
    %c0_i32 = arith.constant 0 : i32
    %c0_i32_0 = arith.constant 0 : i32
    %c0_i32_1 = arith.constant 0 : i32
    return %c0_i32, %c0_i32_0 : i32, i32
  }
  func.func @transform_8(%arg0: i32) -> (i32, i32) {
    %c0_i32 = arith.constant 0 : i32
    %c0_i32_0 = arith.constant 0 : i32
    %c0_i32_1 = arith.constant 0 : i32
    return %c0_i32, %c0_i32_0 : i32, i32
  }
  func.func @transform_9(%arg0: i32) -> (i32, i32) {
    %c0_i32 = arith.constant 0 : i32
    %c0_i32_0 = arith.constant 0 : i32
    return %arg0, %c0_i32 : i32, i32
  }
}

</mosaic_0001>

<llo_original>
// kernel: ann_wsnet_forward.1
$region0: #{ann_wsnet_forward.1}
  #allocation0 [shape = 'u32[]', space=smem, size = 0x4, offset = 0x4, fixed_abs, tag = 'smem constant byte address 0x4 - core index']
  #allocation1 [shape = 'u32[144,128]{1,0:T(1,128)}', space=vmem, size = 0x12000, scoped, tag = 'internal scratch']
  %s0 = inlined_call_operand.vmem [shape: f32[2,32], index: 0, kind: input, shape index: {}]
  %s1 = inlined_call_operand.hbm [shape: f32[32,128], index: 1, kind: input, shape index: {}]
  %s2 = inlined_call_operand.vmem [shape: f32[1,128], index: 2, kind: input, shape index: {}]
  %s3 = inlined_call_operand.vmem [shape: bf16[128,128], index: 3, kind: input, shape index: {}]
  %s4 = inlined_call_operand.vmem [shape: f32[1,128], index: 4, kind: input, shape index: {}]
  %s5 = inlined_call_operand.hbm [shape: bf16[128,128], index: 5, kind: input, shape index: {}]
  %s6 = inlined_call_operand.vmem [shape: f32[1,128], index: 6, kind: input, shape index: {}]
  %s7 = inlined_call_operand.vmem [shape: bf16[128,4], index: 7, kind: input, shape index: {}]
  %s8 = inlined_call_operand.vmem [shape: f32[1,4], index: 8, kind: input, shape index: {}]
  %s9 = inlined_call_operand.hbm [shape: f32[2,4], index: 9, kind: output, shape index: {}]
  %s10 = sld [smem:[#allocation0]]
  $region54: #{ann_wsnet_forward.1} parent=0
    _
  %s12 = ssub.s32 1, %s10
  %s13 = scalar_select 0, %s12, %s10
  $region1: #{ann_wsnet_forward.1} parent=0
    #allocation2 [shape = 'u8[16384]{0}', space=vmem, size = 0x4000, scoped, tag = 'input window, operand 1, single buffered']
    #allocation3 [shape = 's32[1]{0}', space=sflag, size = 0x4, scoped, tag = 'scoped memory for ann_wsnet_forward.1']
    #allocation4 [shape = 's32[1]{0}', space=sflag, size = 0x4, scoped, tag = 'scoped memory for ann_wsnet_forward.1']
    #allocation5 [shape = 'u8[32768]{0}', space=vmem, size = 0x8000, scoped, tag = 'input window, operand 5, single buffered']
    #allocation6 [shape = 's32[1]{0}', space=sflag, size = 0x4, scoped, tag = 'scoped memory for ann_wsnet_forward.1']
    #allocation7 [shape = 'u8[1024]{0}', space=vmem, size = 0x400, scoped, tag = 'output window, operand 0, single buffered']
    %14 = vsyncpa [#allocation3], 0
    %15 = vsyncpa [#allocation6], 0
    %16 = vsyncpa [#allocation4], 0
    // Predicated region
    $region2: #{ann_wsnet_forward.1} parent=1 // pred_check
      _
    $region3: #{ann_wsnet_forward.1} parent=1 // pred_check_branch
      %18 = sbr.rel (0) target = $region5
    $region4: #{ann_wsnet_forward.1} parent=1 // pred_region
      _
    $region5: #{ann_wsnet_forward.1} parent=1 // pred_fallthru
      _
    // Predicated region
    $region6: #{ann_wsnet_forward.1} parent=1 // pred_check
      _
    $region7: #{ann_wsnet_forward.1} parent=1 // pred_check_branch
      %20 = sbr.rel (0) target = $region9
    $region8: #{ann_wsnet_forward.1} parent=1 // pred_region
      %s22 = ssub.s32 512, 512
      %23 = vsyncadd [#allocation3], %s22
      %s24 = sshll.u32 [#allocation2], 4
      %s25 = int_to_ptr.vmem [resolvable:$true] %s24
      %30 = dma.hbm_to_vmem [thread:$0]  %s1, 512, %s25, [#allocation3], 128, 128, 8
    $region9: #{ann_wsnet_forward.1} parent=1 // pred_fallthru
      _
    // Predicated region
    $region10: #{ann_wsnet_forward.1} parent=1 // pred_check
      _
    $region11: #{ann_wsnet_forward.1} parent=1 // pred_check_branch
      %32 = sbr.rel (0) target = $region13
    $region12: #{ann_wsnet_forward.1} parent=1 // pred_region
      _
    $region13: #{ann_wsnet_forward.1} parent=1 // pred_fallthru
      _
    // Predicated region
    $region14: #{ann_wsnet_forward.1} parent=1 // pred_check
      _
    $region15: #{ann_wsnet_forward.1} parent=1 // pred_check_branch
      %34 = sbr.rel (0) target = $region17
    $region16: #{ann_wsnet_forward.1} parent=1 // pred_region
      _
    $region17: #{ann_wsnet_forward.1} parent=1 // pred_fallthru
      _
    // Predicated region
    $region18: #{ann_wsnet_forward.1} parent=1 // pred_check
      _
    $region19: #{ann_wsnet_forward.1} parent=1 // pred_check_branch
      %36 = sbr.rel (0) target = $region21
    $region20: #{ann_wsnet_forward.1} parent=1 // pred_region
      _
    $region21: #{ann_wsnet_forward.1} parent=1 // pred_fallthru
      _
    // Predicated region
    $region22: #{ann_wsnet_forward.1} parent=1 // pred_check
      _
    $region23: #{ann_wsnet_forward.1} parent=1 // pred_check_branch
      %38 = sbr.rel (0) target = $region25
    $region24: #{ann_wsnet_forward.1} parent=1 // pred_region
      %s40 = ssub.s32 1024, 1024
      %41 = vsyncadd [#allocation6], %s40
      %s42 = sshll.u32 [#allocation5], 4
      %s43 = int_to_ptr.vmem [resolvable:$true] %s42
      %48 = dma.hbm_to_vmem [thread:$0]  %s5, 1024, %s43, [#allocation6], 64, 64, 4
    $region25: #{ann_wsnet_forward.1} parent=1 // pred_fallthru
      _
    // Predicated region
    $region26: #{ann_wsnet_forward.1} parent=1 // pred_check
      _
    $region27: #{ann_wsnet_forward.1} parent=1 // pred_check_branch
      %50 = sbr.rel (0) target = $region29
    $region28: #{ann_wsnet_forward.1} parent=1 // pred_region
      _
    $region29: #{ann_wsnet_forward.1} parent=1 // pred_fallthru
      _
    // Predicated region
    $region30: #{ann_wsnet_forward.1} parent=1 // pred_check
      _
    $region31: #{ann_wsnet_forward.1} parent=1 // pred_check_branch
      %52 = sbr.rel (0) target = $region33
    $region32: #{ann_wsnet_forward.1} parent=1 // pred_region
      _
    $region33: #{ann_wsnet_forward.1} parent=1 // pred_fallthru
      _
    // Predicated region
    $region34: #{ann_wsnet_forward.1} parent=1 // pred_check
      _
    $region35: #{ann_wsnet_forward.1} parent=1 // pred_check_branch
      %54 = sbr.rel (0) target = $region37
    $region36: #{ann_wsnet_forward.1} parent=1 // pred_region
      _
    $region37: #{ann_wsnet_forward.1} parent=1 // pred_fallthru
      _
    // Predicated region
    $region38: #{ann_wsnet_forward.1} parent=1 // pred_check
      _
    $region39: #{ann_wsnet_forward.1} parent=1 // pred_check_branch
      %56 = sbr.rel (0) target = $region41
    $region40: #{ann_wsnet_forward.1} parent=1 // pred_region
      %57 = dma.done [#allocation3], 512
    $region41: #{ann_wsnet_forward.1} parent=1 // pred_fallthru
      _
    // Predicated region
    $region42: #{ann_wsnet_forward.1} parent=1 // pred_check
      _
    $region43: #{ann_wsnet_forward.1} parent=1 // pred_check_branch
      %59 = sbr.rel (0) target = $region45
    $region44: #{ann_wsnet_forward.1} parent=1 // pred_region
      %60 = dma.done [#allocation6], 1024
    $region45: #{ann_wsnet_forward.1} parent=1 // pred_fallthru
      _
    %v62 = vld [vmem:[%s0] sm:$0x3]
    %v63 = vld [vmem:[#allocation2] sm:$0xff]
    %v64 = vld [vmem:[#allocation2 + $0x8] sm:$0xff]
    %v65 = vld [vmem:[#allocation2 + $0x10] sm:$0xff]
    %v66 = vld [vmem:[#allocation2 + $0x18] sm:$0xff]
    %v67 = vld [vmem:[%s2] sm:$0x1]
    %v69 = vlaneseq
    %v70 = vshrl.u32 %v69, 7
    %v71 = vsub.s32 0, %v70
    %v72 = vrot.slane %v67, %v71
    %vm74 = vcmask 261120
    %v76 = vsel %vm74, %v62, 0
    %78 = vmatprep.subr.mxu0 0.0
    %79 = vmatpush1.msra.mxu0 %v63
    %80 = vmatprep.subr.mxu0 0.0
    %81 = vmatpush1.msra.mxu0 %v64
    %82 = vmatprep.subr.mxu0 0.0
    %83 = vmatpush1.msra.mxu0 %v65
    %84 = vmatprep.subr.mxu0 0.0
    %85 = vmatpush1.msra.mxu0 %v66
    %86 = vmatprep.subr.mxu0 0.0
    %87 = vmatpush1.msra.mxu0 0.0
    %88 = vmatprep.subr.mxu0 0.0
    %89 = vmatpush1.msra.mxu0 0.0
    %90 = vmatprep.subr.mxu0 0.0
    %91 = vmatpush1.msra.mxu0 0.0
    %92 = vmatprep.subr.mxu0 0.0
    %93 = vmatpush1.msra.mxu0 0.0
    %94 = vmatprep.subr.mxu0 0.0
    %95 = vmatpush1.msra.mxu0 0.0
    %96 = vmatprep.subr.mxu0 0.0
    %97 = vmatpush1.msra.mxu0 0.0
    %98 = vmatprep.subr.mxu0 0.0
    %99 = vmatpush1.msra.mxu0 0.0
    %100 = vmatprep.subr.mxu0 0.0
    %101 = vmatpush1.msra.mxu0 0.0
    %102 = vmatprep.subr.mxu0 0.0
    %103 = vmatpush1.msra.mxu0 0.0
    %104 = vmatprep.subr.mxu0 0.0
    %105 = vmatpush1.msra.mxu0 0.0
    %106 = vmatprep.subr.mxu0 0.0
    %107 = vmatpush1.msra.mxu0 0.0
    %108 = vmatprep.subr.mxu0 0.0
    %109 = vmatpush1.msra.mxu0 0.0
    %110 = vmatprep.subr.mxu0 0.0
    %111 = vmatpush1.msra.mxu0 0.0
    %112 = vmatprep.subr.mxu0 0.0
    %113 = vmatpush1.msra.mxu0 0.0
    %114 = vmatprep.subr.mxu0 0.0
    %115 = vmatpush1.msra.mxu0 0.0
    %116 = vmatprep.subr.mxu0 0.0
    %117 = vmatpush1.msra.mxu0 0.0
    %118 = vmatprep.subr.mxu0 0.0
    %119 = vmatpush1.msra.mxu0 0.0
    %120 = vmatprep.subr.mxu0 0.0
    %121 = vmatpush1.msra.mxu0 0.0
    %122 = vmatprep.subr.mxu0 0.0
    %123 = vmatpush1.msra.mxu0 0.0
    %124 = vmatprep.subr.mxu0 0.0
    %125 = vmatpush1.msra.mxu0 0.0
    %126 = vmatprep.subr.mxu0 0.0
    %127 = vmatpush1.msra.mxu0 0.0
    %128 = vmatprep.subr.mxu0 0.0
    %129 = vmatpush1.msra.mxu0 0.0
    %130 = vmatprep.subr.mxu0 0.0
    %131 = vmatpush1.msra.mxu0 0.0
    %132 = vmatprep.subr.mxu0 0.0
    %133 = vmatpush1.msra.mxu0 0.0
    %134 = vmatprep.subr.mxu0 0.0
    %135 = vmatpush1.msra.mxu0 0.0
    %136 = vmatprep.subr.mxu0 0.0
    %137 = vmatpush1.msra.mxu0 0.0
    %138 = vmatprep.subr.mxu0 0.0
    %139 = vmatpush1.msra.mxu0 0.0
    %140 = vmatprep.subr.mxu0 0.0
    %141 = vmatpush1.msra.mxu0 0.0
    %142 = vmatprep.mubr.f32.mxu0 0.0
    %143 = vmatmul.mubr.f32.gmra.mrb[0].mxu0 %v76
    %v144 = vpop.f32.mrb[0].mxu0
    %v145 = vadd.f32 %v72, %v144
    %v146 = vpop.f32.mrb[0].mxu0
    %147 = vdwg.mxu0
    %v148 = vmax.f32 %v145, 0.0
    %v149 = vpack.c.bf16 %v148, %v148
    %v150 = vld [vmem:[%s3] sm:$0xf]
    %v151 = vld [vmem:[%s3 + $0x4] sm:$0xf]
    %v152 = vld [vmem:[%s3 + $0x8] sm:$0xf]
    %v153 = vld [vmem:[%s3 + $0xc] sm:$0xf]
    %v154 = vld [vmem:[%s3 + $0x10] sm:$0xf]
    %v155 = vld [vmem:[%s3 + $0x14] sm:$0xf]
    %v156 = vld [vmem:[%s3 + $0x18] sm:$0xf]
    %v157 = vld [vmem:[%s3 + $0x1c] sm:$0xf]
    %v158 = vld [vmem:[%s3 + $0x20] sm:$0xf]
    %v159 = vld [vmem:[%s3 + $0x24] sm:$0xf]
    %v160 = vld [vmem:[%s3 + $0x28] sm:$0xf]
    %v161 = vld [vmem:[%s3 + $0x2c] sm:$0xf]
    %v162 = vld [vmem:[%s3 + $0x30] sm:$0xf]
    %v163 = vld [vmem:[%s3 + $0x34] sm:$0xf]
    %v164 = vld [vmem:[%s3 + $0x38] sm:$0xf]
    %v165 = vld [vmem:[%s3 + $0x3c] sm:$0xf]
    %v166 = vld [vmem:[%s4] sm:$0x1]
    %v168 = vlaneseq
    %v169 = vshrl.u32 %v168, 7
    %v170 = vsub.s32 0, %v169
    %v171 = vrot.slane %v166, %v170
    %v189 = vunpack.c.l.b16 %v150
    %v190 = vunpack.c.l.b16 %v151
    %v191 = vunpack.c.l.b16 %v152
    %v192 = vunpack.c.l.b16 %v153
    %v193 = vunpack.c.l.b16 %v154
    %v194 = vunpack.c.l.b16 %v155
    %v195 = vunpack.c.l.b16 %v156
    %v196 = vunpack.c.l.b16 %v157
    %v197 = vunpack.c.l.b16 %v158
    %v198 = vunpack.c.l.b16 %v159
    %v199 = vunpack.c.l.b16 %v160
    %v200 = vunpack.c.l.b16 %v161
    %v201 = vunpack.c.l.b16 %v162
    %v202 = vunpack.c.l.b16 %v163
    %v203 = vunpack.c.l.b16 %v164
    %v204 = vunpack.c.l.b16 %v165
    %v205 = vpack.c.b16 %v190, %v189
    %v206 = vpack.c.b16 %v192, %v191
    %v207 = vpack.c.b16 %v194, %v193
    %v208 = vpack.c.b16 %v196, %v195
    %v209 = vpack.c.b16 %v198, %v197
    %v210 = vpack.c.b16 %v200, %v199
    %v211 = vpack.c.b16 %v202, %v201
    %v212 = vpack.c.b16 %v204, %v203
    %221 = vmatprep.subr.bf16.mxu0 0
    %222 = vmatpush1.bf16.msra.mxu0 %v205
    %223 = vmatprep.subr.bf16.mxu0 0
    %224 = vmatpush1.bf16.msra.mxu0 %v206
    %225 = vmatprep.subr.bf16.mxu0 0
    %226 = vmatpush1.bf16.msra.mxu0 %v207
    %227 = vmatprep.subr.bf16.mxu0 0
    %228 = vmatpush1.bf16.msra.mxu0 %v208
    %229 = vmatprep.subr.bf16.mxu0 0
    %230 = vmatpush1.bf16.msra.mxu0 %v209
    %231 = vmatprep.subr.bf16.mxu0 0
    %232 = vmatpush1.bf16.msra.mxu0 %v210
    %233 = vmatprep.subr.bf16.mxu0 0
    %234 = vmatpush1.bf16.msra.mxu0 %v211
    %235 = vmatprep.subr.bf16.mxu0 0
    %236 = vmatpush1.bf16.msra.mxu0 %v212
    %237 = vmatprep.subr.bf16.mxu0 0
    %238 = vmatpush1.bf16.msra.mxu0 0
    %239 = vmatprep.subr.bf16.mxu0 0
    %240 = vmatpush1.bf16.msra.mxu0 0
    %241 = vmatprep.subr.bf16.mxu0 0
    %242 = vmatpush1.bf16.msra.mxu0 0
    %243 = vmatprep.subr.bf16.mxu0 0
    %244 = vmatpush1.bf16.msra.mxu0 0
    %245 = vmatprep.subr.bf16.mxu0 0
    %246 = vmatpush1.bf16.msra.mxu0 0
    %247 = vmatprep.subr.bf16.mxu0 0
    %248 = vmatpush1.bf16.msra.mxu0 0
    %249 = vmatprep.subr.bf16.mxu0 0
    %250 = vmatpush1.bf16.msra.mxu0 0
    %251 = vmatprep.subr.bf16.mxu0 0
    %252 = vmatpush1.bf16.msra.mxu0 0
    %253 = vmatprep.mubr.bf16.mxu0 0
    %254 = vmatmul.mubr.bf16.gmra.mrb[0].mxu0 %v149
    %v255 = vpop.f32.mrb[0].mxu0
    %v256 = vadd.f32 %v171, %v255
    %v257 = vpop.f32.mrb[0].mxu0
    %v258 = vpop.f32.mrb[0].mxu0
    %v259 = vpop.f32.mrb[0].mxu0
    %260 = vdwg.mxu0
    %v261 = vmax.f32 %v256, 0.0
    %v262 = vpack.c.bf16 %v261, %v261
    %v263 = vld [vmem:[#allocation5] sm:$0xf]
    %v264 = vld [vmem:[#allocation5 + $0x4] sm:$0xf]
    %v265 = vld [vmem:[#allocation5 + $0x8] sm:$0xf]
    %v266 = vld [vmem:[#allocation5 + $0xc] sm:$0xf]
    %v267 = vld [vmem:[#allocation5 + $0x10] sm:$0xf]
    %v268 = vld [vmem:[#allocation5 + $0x14] sm:$0xf]
    %v269 = vld [vmem:[#allocation5 + $0x18] sm:$0xf]
    %v270 = vld [vmem:[#allocation5 + $0x1c] sm:$0xf]
    %v271 = vld [vmem:[#allocation5 + $0x20] sm:$0xf]
    %v272 = vld [vmem:[#allocation5 + $0x24] sm:$0xf]
    %v273 = vld [vmem:[#allocation5 + $0x28] sm:$0xf]
    %v274 = vld [vmem:[#allocation5 + $0x2c] sm:$0xf]
    %v275 = vld [vmem:[#allocation5 + $0x30] sm:$0xf]
    %v276 = vld [vmem:[#allocation5 + $0x34] sm:$0xf]
    %v277 = vld [vmem:[#allocation5 + $0x38] sm:$0xf]
    %v278 = vld [vmem:[#allocation5 + $0x3c] sm:$0xf]
    %v279 = vld [vmem:[%s6] sm:$0x1]
    %v281 = vlaneseq
    %v282 = vshrl.u32 %v281, 7
    %v283 = vsub.s32 0, %v282
    %v284 = vrot.slane %v279, %v283
    %v302 = vunpack.c.l.b16 %v263
    %v303 = vunpack.c.l.b16 %v264
    %v304 = vunpack.c.l.b16 %v265
    %v305 = vunpack.c.l.b16 %v266
    %v306 = vunpack.c.l.b16 %v267
    %v307 = vunpack.c.l.b16 %v268
    %v308 = vunpack.c.l.b16 %v269
    %v309 = vunpack.c.l.b16 %v270
    %v310 = vunpack.c.l.b16 %v271
    %v311 = vunpack.c.l.b16 %v272
    %v312 = vunpack.c.l.b16 %v273
    %v313 = vunpack.c.l.b16 %v274
    %v314 = vunpack.c.l.b16 %v275
    %v315 = vunpack.c.l.b16 %v276
    %v316 = vunpack.c.l.b16 %v277
    %v317 = vunpack.c.l.b16 %v278
    %v318 = vpack.c.b16 %v303, %v302
    %v319 = vpack.c.b16 %v305, %v304
    %v320 = vpack.c.b16 %v307, %v306
    %v321 = vpack.c.b16 %v309, %v308
    %v322 = vpack.c.b16 %v311, %v310
    %v323 = vpack.c.b16 %v313, %v312
    %v324 = vpack.c.b16 %v315, %v314
    %v325 = vpack.c.b16 %v317, %v316
    %334 = vmatprep.subr.bf16.mxu0 0
    %335 = vmatpush1.bf16.msra.mxu0 %v318
    %336 = vmatprep.subr.bf16.mxu0 0
    %337 = vmatpush1.bf16.msra.mxu0 %v319
    %338 = vmatprep.subr.bf16.mxu0 0
    %339 = vmatpush1.bf16.msra.mxu0 %v320
    %340 = vmatprep.subr.bf16.mxu0 0
    %341 = vmatpush1.bf16.msra.mxu0 %v321
    %342 = vmatprep.subr.bf16.mxu0 0
    %343 = vmatpush1.bf16.msra.mxu0 %v322
    %344 = vmatprep.subr.bf16.mxu0 0
    %345 = vmatpush1.bf16.msra.mxu0 %v323
    %346 = vmatprep.subr.bf16.mxu0 0
    %347 = vmatpush1.bf16.msra.mxu0 %v324
    %348 = vmatprep.subr.bf16.mxu0 0
    %349 = vmatpush1.bf16.msra.mxu0 %v325
    %350 = vmatprep.subr.bf16.mxu0 0
    %351 = vmatpush1.bf16.msra.mxu0 0
    %352 = vmatprep.subr.bf16.mxu0 0
    %353 = vmatpush1.bf16.msra.mxu0 0
    %354 = vmatprep.subr.bf16.mxu0 0
    %355 = vmatpush1.bf16.msra.mxu0 0
    %356 = vmatprep.subr.bf16.mxu0 0
    %357 = vmatpush1.bf16.msra.mxu0 0
    %358 = vmatprep.subr.bf16.mxu0 0
    %359 = vmatpush1.bf16.msra.mxu0 0
    %360 = vmatprep.subr.bf16.mxu0 0
    %361 = vmatpush1.bf16.msra.mxu0 0
    %362 = vmatprep.subr.bf16.mxu0 0
    %363 = vmatpush1.bf16.msra.mxu0 0
    %364 = vmatprep.subr.bf16.mxu0 0
    %365 = vmatpush1.bf16.msra.mxu0 0
    %366 = vmatprep.mubr.bf16.mxu0 0
    %367 = vmatmul.mubr.bf16.gmra.mrb[0].mxu0 %v262
    %v368 = vpop.f32.mrb[0].mxu0
    %v369 = vadd.f32 %v284, %v368
    %v370 = vpop.f32.mrb[0].mxu0
    %v371 = vpop.f32.mrb[0].mxu0
    %v372 = vpop.f32.mrb[0].mxu0
    %373 = vdwg.mxu0
    %v374 = vmax.f32 %v369, 0.0
    %v375 = vpack.c.bf16 %v374, %v374
    %v376 = vld [vmem:[%s7] sm:$0xf]
    %v377 = vld [vmem:[%s7 + $0x4] sm:$0xf]
    %v378 = vld [vmem:[%s7 + $0x8] sm:$0xf]
    %v379 = vld [vmem:[%s7 + $0xc] sm:$0xf]
    %v380 = vld [vmem:[%s7 + $0x10] sm:$0xf]
    %v381 = vld [vmem:[%s7 + $0x14] sm:$0xf]
    %v382 = vld [vmem:[%s7 + $0x18] sm:$0xf]
    %v383 = vld [vmem:[%s7 + $0x1c] sm:$0xf]
    %v384 = vld [vmem:[%s7 + $0x20] sm:$0xf]
    %v385 = vld [vmem:[%s7 + $0x24] sm:$0xf]
    %v386 = vld [vmem:[%s7 + $0x28] sm:$0xf]
    %v387 = vld [vmem:[%s7 + $0x2c] sm:$0xf]
    %v388 = vld [vmem:[%s7 + $0x30] sm:$0xf]
    %v389 = vld [vmem:[%s7 + $0x34] sm:$0xf]
    %v390 = vld [vmem:[%s7 + $0x38] sm:$0xf]
    %v391 = vld [vmem:[%s7 + $0x3c] sm:$0xf]
    %v392 = vld [vmem:[%s8] sm:$0x1]
    %v394 = vlaneseq
    %v395 = vshrl.u32 %v394, 7
    %v396 = vsub.s32 0, %v395
    %v397 = vrot.slane %v392, %v396
    %v415 = vunpack.c.l.b16 %v376
    %v416 = vunpack.c.l.b16 %v377
    %v417 = vunpack.c.l.b16 %v378
    %v418 = vunpack.c.l.b16 %v379
    %v419 = vunpack.c.l.b16 %v380
    %v420 = vunpack.c.l.b16 %v381
    %v421 = vunpack.c.l.b16 %v382
    %v422 = vunpack.c.l.b16 %v383
    %v423 = vunpack.c.l.b16 %v384
    %v424 = vunpack.c.l.b16 %v385
    %v425 = vunpack.c.l.b16 %v386
    %v426 = vunpack.c.l.b16 %v387
    %v427 = vunpack.c.l.b16 %v388
    %v428 = vunpack.c.l.b16 %v389
    %v429 = vunpack.c.l.b16 %v390
    %v430 = vunpack.c.l.b16 %v391
    %v431 = vpack.c.b16 %v416, %v415
    %v432 = vpack.c.b16 %v418, %v417
    %v433 = vpack.c.b16 %v420, %v419
    %v434 = vpack.c.b16 %v422, %v421
    %v435 = vpack.c.b16 %v424, %v423
    %v436 = vpack.c.b16 %v426, %v425
    %v437 = vpack.c.b16 %v428, %v427
    %v438 = vpack.c.b16 %v430, %v429
    %447 = vmatprep.subr.bf16.mxu0 0
    %448 = vmatpush1.bf16.msra.mxu0 %v431
    %449 = vmatprep.subr.bf16.mxu0 0
    %450 = vmatpush1.bf16.msra.mxu0 %v432
    %451 = vmatprep.subr.bf16.mxu0 0
    %452 = vmatpush1.bf16.msra.mxu0 %v433
    %453 = vmatprep.subr.bf16.mxu0 0
    %454 = vmatpush1.bf16.msra.mxu0 %v434
    %455 = vmatprep.subr.bf16.mxu0 0
    %456 = vmatpush1.bf16.msra.mxu0 %v435
    %457 = vmatprep.subr.bf16.mxu0 0
    %458 = vmatpush1.bf16.msra.mxu0 %v436
    %459 = vmatprep.subr.bf16.mxu0 0
    %460 = vmatpush1.bf16.msra.mxu0 %v437
    %461 = vmatprep.subr.bf16.mxu0 0
    %462 = vmatpush1.bf16.msra.mxu0 %v438
    %463 = vmatprep.subr.bf16.mxu0 0
    %464 = vmatpush1.bf16.msra.mxu0 0
    %465 = vmatprep.subr.bf16.mxu0 0
    %466 = vmatpush1.bf16.msra.mxu0 0
    %467 = vmatprep.subr.bf16.mxu0 0
    %468 = vmatpush1.bf16.msra.mxu0 0
    %469 = vmatprep.subr.bf16.mxu0 0
    %470 = vmatpush1.bf16.msra.mxu0 0
    %471 = vmatprep.subr.bf16.mxu0 0
    %472 = vmatpush1.bf16.msra.mxu0 0
    %473 = vmatprep.subr.bf16.mxu0 0
    %474 = vmatpush1.bf16.msra.mxu0 0
    %475 = vmatprep.subr.bf16.mxu0 0
    %476 = vmatpush1.bf16.msra.mxu0 0
    %477 = vmatprep.subr.bf16.mxu0 0
    %478 = vmatpush1.bf16.msra.mxu0 0
    %479 = vmatprep.mubr.bf16.mxu0 0
    %480 = vmatmul.mubr.bf16.gmra.mrb[0].mxu0 %v375
    %v481 = vpop.f32.mrb[0].mxu0
    %v482 = vadd.f32 %v397, %v481
    %v483 = vpop.f32.mrb[0].mxu0
    %v484 = vpop.f32.mrb[0].mxu0
    %v485 = vpop.f32.mrb[0].mxu0
    %486 = vdwg.mxu0
    %vm487 = vcmask 25600
    %488 = vst.msk [vmem:[#allocation7] sm:$0x3] %vm487, %v482
    // Predicated region
    $region46: #{ann_wsnet_forward.1} parent=1 // pred_check
      _
    $region47: #{ann_wsnet_forward.1} parent=1 // pred_check_branch
      %490 = sbr.rel (0) target = $region49
    $region48: #{ann_wsnet_forward.1} parent=1 // pred_region
      %s492 = ssub.s32 32, 32
      %493 = vsyncadd [#allocation4], %s492
      %s495 = sshll.u32 [#allocation7], 4
      %s496 = int_to_ptr.vmem [resolvable:$true] %s495
      %498 = dma.vmem_to_hbm [thread:$0]  %s496, 32, %s9, [#allocation4]
    $region49: #{ann_wsnet_forward.1} parent=1 // pred_fallthru
      _
    // Predicated region
    $region50: #{ann_wsnet_forward.1} parent=1 // pred_check
      _
    $region51: #{ann_wsnet_forward.1} parent=1 // pred_check_branch
      %500 = sbr.rel (0) target = $region53
    $region52: #{ann_wsnet_forward.1} parent=1 // pred_region
      %501 = dma.done [#allocation4], 32
    $region53: #{ann_wsnet_forward.1} parent=1 // pred_fallthru
      _
    %502 = vsyncpa [#allocation3], 1
    %503 = vsyncpa [#allocation6], 1
    %504 = vsyncpa [#allocation4], 1

</llo_original>
